<compile_context>
chip_gen: v5e
topology: v5e:2x2
jax: 0.10.0
libtpu: 0.0.40
codegen_flags: <defaults>
</compile_context>

<pallas_src>
import jax
import jax.numpy as jnp
from jax.experimental import pallas as pl
from jax.experimental.pallas import tpu as pltpu

N_BITS = 8
QMIN = 0.0
QMAX = float(2 ** N_BITS - 1)

_MAX_BLOCK_ROWS = 16384  # raised from 1024 per review (narrow-C tall inputs)


def _vmem_budgets():
    """Per-generation (tile_budget_bytes, scoped_vmem_limit_bytes)."""
    cap = None
    try:
        cap = pltpu.get_tpu_info().vmem_capacity_bytes
    except Exception:
        cap = None
    if cap is not None and cap >= 100 * 1024 * 1024:
        # v5e / v6e: 128 MiB physical VMEM -> big tiles, generous scoped limit.
        return 64 * 1024 * 1024, 96 * 1024 * 1024
    # v7x (64 MiB physical) or unknown: conservative, leaves headroom for the
    # double-buffered tiles plus in-kernel f32 temporaries.
    return 20 * 1024 * 1024, 40 * 1024 * 1024


def _pick_block_rows(n_rows, n_cols, itemsize, tile_budget):
    """Largest row tile (multiple of 8) fitting the VMEM byte budget, while
    keeping the row grid at >= 2 steps (ideally an even count) for v7x 2-TC
    sharding."""
    if n_rows <= 8:
        return n_rows  # full-dim block

    # Bytes kept live in VMEM per row of tile:
    #   x in (double-buffered) + x_dq out (double-buffered) in native dtype,
    #   plus ~2 tile-sized f32 temporaries from the elementwise chain.
    bytes_per_row = (4 * itemsize + 2 * 4) * n_cols
    br = tile_budget // max(bytes_per_row, 1)

    # At least 2 grid steps so the "parallel" axis can span both v7x TCs.
    half = ((-(-n_rows // 2)) + 7) // 8 * 8
    br = min(br, half, _MAX_BLOCK_ROWS)
    br = max(8, (br // 8) * 8)

    # Prefer an even number of steps (balanced split across 2 TCs).
    steps = -(-n_rows // br)
    if steps > 1 and steps % 2 == 1:
        br2 = ((-(-n_rows // (steps + 1))) + 7) // 8 * 8
        if br2 >= 8 and (-(-n_rows // br2)) % 2 == 0:
            br = br2
    return br


def _quantizer_kernel(x_ref, up_ref, low_ref, xdq_ref, scale_ref, rzp_ref):
    # Per-token (per-row) min / max over the last axis, in the native dtype
    # (exact for min/max; avoids a full-tile f32 copy for sub-f32 inputs).
    x = x_ref[...]
    xmin = jnp.min(x, axis=-1, keepdims=True).astype(jnp.float32)
    xmax = jnp.max(x, axis=-1, keepdims=True).astype(jnp.float32)

    # Learnable weight clipping (lwc): shrink the range by sigmoid(factor).
    up = jax.nn.sigmoid(up_ref[...].astype(jnp.float32))
    low = jax.nn.sigmoid(low_ref[...].astype(jnp.float32))
    xmax = up * xmax
    xmin = low * xmin

    # Asymmetric scale / zero-point (PyTorch keeps the UNclamped scale).
    # NOTE: rows with xmax == xmin give scale == 0 -> NaN output row, matching
    # the PyTorch module bug-for-bug (no CLIPMIN clamp survives).
    scale = (xmax - xmin) / QMAX            # per-row only: block_rows values
    inv_scale = 1.0 / scale                 # exact per-row reciprocal (cheap)
    rzp = jnp.round(jnp.clip(-xmin * inv_scale, -10000.0, 10000.0))

    # Zero-point folded into the clip bounds (exactly equivalent, fewer VPU ops).
    lo = -rzp                               # (rows, 1): broadcast per-vreg for free
    hi = QMAX - rzp

    # round_ste forward value is just round(); f32 upcast only in this chain.
    x_dq = jnp.clip(jnp.round(x.astype(jnp.float32) * inv_scale), lo, hi) * scale

    xdq_ref[...] = x_dq.astype(xdq_ref.dtype)
    scale_ref[...] = scale.astype(scale_ref.dtype)
    rzp_ref[...] = rzp.astype(rzp_ref.dtype)


def uniform_affine_quantize(x, upbound_factor, lowbound_factor, *, block_rows=None):
    """x: [R, C] float, factors: [R, 1] float.
    Returns (x_dequant [R, C], scale [R, 1], round_zero_point [R, 1])."""
    R, C = x.shape
    itemsize = jnp.dtype(x.dtype).itemsize
    tile_budget, vmem_limit = _vmem_budgets()
    if block_rows is None:
        block_rows = _pick_block_rows(R, C, itemsize, tile_budget)

    grid = (pl.cdiv(R, block_rows),)

    cost = pl.CostEstimate(
        flops=7 * R * C,                     # min/max + ~5 elementwise ops / element
        transcendentals=2 * R,               # two sigmoids per row
        bytes_accessed=2 * R * C * itemsize + 2 * R * itemsize + 2 * R * 4,
    )

    x_dq, scale, rzp = pl.pallas_call(
        _quantizer_kernel,
        out_shape=(
            jax.ShapeDtypeStruct((R, C), x.dtype),
            jax.ShapeDtypeStruct((R, 1), jnp.float32),
            jax.ShapeDtypeStruct((R, 1), jnp.float32),
        ),
        grid_spec=pl.GridSpec(
            grid=grid,
            in_specs=[
                pl.BlockSpec((block_rows, C), lambda i: (i, 0)),
                pl.BlockSpec((block_rows, 1), lambda i: (i, 0)),
                pl.BlockSpec((block_rows, 1), lambda i: (i, 0)),
            ],
            out_specs=[
                pl.BlockSpec((block_rows, C), lambda i: (i, 0)),
                pl.BlockSpec((block_rows, 1), lambda i: (i, 0)),
                pl.BlockSpec((block_rows, 1), lambda i: (i, 0)),
            ],
        ),
        compiler_params=pltpu.CompilerParams(
            dimension_semantics=("parallel",),   # shards rows over v7x's 2 TCs
            vmem_limit_bytes=vmem_limit,
        ),
        cost_estimate=cost,
    )(x, upbound_factor, lowbound_factor)

    return x_dq, scale, rzp


# ----------------------------- references ----------------------------------

def _reference_kernel_order(x, up, low):
    """Mirrors the kernel's numeric ordering (per-row reciprocal multiply)."""
    xmin = jnp.min(x, axis=-1, keepdims=True)
    xmax = jnp.max(x, axis=-1, keepdims=True)
    xmax = jax.nn.sigmoid(up) * xmax
    xmin = jax.nn.sigmoid(low) * xmin
    scale = (xmax - xmin) / QMAX
    inv = 1.0 / scale
    rzp = jnp.round(jnp.clip(-xmin * inv, -10000.0, 10000.0))
    x_int = jnp.clip(jnp.round(x * inv) + rzp, QMIN, QMAX)
    return (x_int - rzp) * scale, scale, rzp


def _reference_torch(x, up, low):
    """Torch-faithful ordering (per-element division)."""
    xmin = jnp.min(x, axis=-1, keepdims=True)
    xmax = jnp.max(x, axis=-1, keepdims=True)
    xmax = jax.nn.sigmoid(up) * xmax
    xmin = jax.nn.sigmoid(low) * xmin
    scale = (xmax - xmin) / QMAX
    rzp = jnp.round(jnp.clip(-xmin / scale, -10000.0, 10000.0))
    x_int = jnp.clip(jnp.round(x / scale) + rzp, QMIN, QMAX)
    return (x_int - rzp) * scale, scale, rzp


if __name__ == "__main__":
    key = jax.random.PRNGKey(0)
    # Small weight-like matrix [out_features, in_features]; R is intentionally
    # not a tile multiple to exercise the ragged (un-padded) tail-block path.
    R, C = 36, 128
    x = jax.random.normal(key, (R, C), dtype=jnp.float32)

    # nn.Parameter(torch.ones((dim1, 1)) * 4.0)
    upbound_factor = jnp.ones((R, 1), dtype=jnp.float32) * 4.0
    lowbound_factor = jnp.ones((R, 1), dtype=jnp.float32) * 4.0

    x_dq, scale, rzp = uniform_affine_quantize(x, upbound_factor, lowbound_factor)
    jax.block_until_ready((x_dq, scale, rzp))

    # Tight check against the reference that uses the same numeric ordering.
    r_dq, r_scale, r_rzp = _reference_kernel_order(x, upbound_factor, lowbound_factor)
    assert jnp.allclose(x_dq, r_dq, atol=1e-5, rtol=1e-5)
    assert jnp.allclose(scale, r_scale, atol=1e-6, rtol=1e-6)
    assert jnp.allclose(rzp, r_rzp)

    # Torch-faithful (divide-based) check: results may differ only by a single
    # quantization step on elements whose pre-round value sits within 1 ULP of
    # a .5 boundary (documented deviation); assert that bound and that the
    # fraction of such elements is negligible.
    t_dq, t_scale, t_rzp = _reference_torch(x, upbound_factor, lowbound_factor)
    assert jnp.allclose(scale, t_scale, atol=1e-6, rtol=1e-6)
    assert bool(jnp.all(jnp.abs(rzp - t_rzp) <= 1.0))
    diff = jnp.abs(x_dq - t_dq)
    assert bool(jnp.all(diff <= t_scale * 1.001 + 1e-6))
    assert float(jnp.mean(diff > 1e-4)) < 1e-2

    print("KERNEL_OK")
</pallas_src>

<mosaic_0001>
module attributes {stable_mosaic.version = 11 : i64} {
  func.func @_quantizer_kernel(%arg0: i32, %arg1: memref<24x128xf32, #tpu.memory_space<vmem>>, %arg2: memref<24x1xf32, #tpu.memory_space<vmem>>, %arg3: memref<24x1xf32, #tpu.memory_space<vmem>>, %arg4: memref<24x128xf32, #tpu.memory_space<vmem>>, %arg5: memref<24x1xf32, #tpu.memory_space<vmem>>, %arg6: memref<24x1xf32, #tpu.memory_space<vmem>>) attributes {dimension_semantics = [#tpu.dimension_semantics<parallel>], iteration_bounds = array<i64: 2>, scalar_prefetch = 0 : i64, scratch_operands = 0 : i64, tpu.core_type = #tpu.core_type<tc>, window_params = [{transform_indices = @transform_0, window_bounds = array<i64: 24, 128>}, {transform_indices = @transform_1, window_bounds = array<i64: 24, 1>}, {transform_indices = @transform_2, window_bounds = array<i64: 24, 1>}, {transform_indices = @transform_3, window_bounds = array<i64: 24, 128>}, {transform_indices = @transform_4, window_bounds = array<i64: 24, 1>}, {transform_indices = @transform_5, window_bounds = array<i64: 24, 1>}]} {
    %c0 = arith.constant 0 : index
    %c0_0 = arith.constant 0 : index
    %0 = vector.load %arg1[%c0, %c0_0] : memref<24x128xf32, #tpu.memory_space<vmem>>, vector<24x128xf32>
    %cst = arith.constant dense<0x7F800000> : vector<24xf32>
    %1 = vector.multi_reduction <minimumf>, %0, %cst [1] : vector<24x128xf32> to vector<24xf32>
    %2 = vector.shape_cast %1 : vector<24xf32> to vector<24x1xf32>
    %cst_1 = arith.constant dense<0xFF800000> : vector<24xf32>
    %3 = vector.multi_reduction <maximumf>, %0, %cst_1 [1] : vector<24x128xf32> to vector<24xf32>
    %4 = vector.shape_cast %3 : vector<24xf32> to vector<24x1xf32>
    %c0_2 = arith.constant 0 : index
    %c0_3 = arith.constant 0 : index
    %5 = vector.load %arg2[%c0_2, %c0_3] : memref<24x1xf32, #tpu.memory_space<vmem>>, vector<24x1xf32>
    %6 = arith.negf %5 : vector<24x1xf32>
    %7 = math.exp %6 : vector<24x1xf32>
    %cst_4 = arith.constant 1.000000e+00 : f32
    %8 = vector.broadcast %cst_4 : f32 to vector<24x1xf32>
    %9 = arith.addf %8, %7 : vector<24x1xf32>
    %10 = arith.divf %8, %9 : vector<24x1xf32>
    %c0_5 = arith.constant 0 : index
    %c0_6 = arith.constant 0 : index
    %11 = vector.load %arg3[%c0_5, %c0_6] : memref<24x1xf32, #tpu.memory_space<vmem>>, vector<24x1xf32>
    %12 = arith.negf %11 : vector<24x1xf32>
    %13 = math.exp %12 : vector<24x1xf32>
    %cst_7 = arith.constant 1.000000e+00 : f32
    %14 = vector.broadcast %cst_7 : f32 to vector<24x1xf32>
    %15 = arith.addf %14, %13 : vector<24x1xf32>
    %16 = arith.divf %14, %15 : vector<24x1xf32>
    %17 = arith.mulf %10, %4 : vector<24x1xf32>
    %18 = arith.mulf %16, %2 : vector<24x1xf32>
    %19 = arith.subf %17, %18 : vector<24x1xf32>
    %cst_8 = arith.constant 2.550000e+02 : f32
    %20 = vector.broadcast %cst_8 : f32 to vector<24x1xf32>
    %21 = arith.divf %19, %20 : vector<24x1xf32>
    %cst_9 = arith.constant 1.000000e+00 : f32
    %22 = vector.broadcast %cst_9 : f32 to vector<24x1xf32>
    %23 = arith.divf %22, %21 : vector<24x1xf32>
    %cst_10 = arith.constant 0.000000e+00 : f32
    %24 = vector.broadcast %cst_10 : f32 to vector<24x1xf32>
    %25 = arith.subf %24, %18 : vector<24x1xf32>
    %26 = arith.mulf %25, %23 : vector<24x1xf32>
    %cst_11 = arith.constant -1.000000e+04 : f32
    %cst_12 = arith.constant 1.000000e+04 : f32
    %27 = vector.broadcast %cst_11 : f32 to vector<24x1xf32>
    %28 = arith.maximumf %27, %26 : vector<24x1xf32>
    %29 = vector.broadcast %cst_12 : f32 to vector<24x1xf32>
    %30 = arith.minimumf %29, %28 : vector<24x1xf32>
    %31 = math.roundeven %30 : vector<24x1xf32>
    %cst_13 = arith.constant 0.000000e+00 : f32
    %32 = vector.broadcast %cst_13 : f32 to vector<24x1xf32>
    %33 = arith.subf %32, %31 : vector<24x1xf32>
    %cst_14 = arith.constant 2.550000e+02 : f32
    %34 = vector.broadcast %cst_14 : f32 to vector<24x1xf32>
    %35 = arith.subf %34, %31 : vector<24x1xf32>
    %36 = vector.broadcast %23 : vector<24x1xf32> to vector<24x128xf32>
    %37 = arith.mulf %0, %36 : vector<24x128xf32>
    %38 = math.roundeven %37 : vector<24x128xf32>
    %39 = vector.broadcast %33 : vector<24x1xf32> to vector<24x128xf32>
    %40 = arith.maximumf %39, %38 : vector<24x128xf32>
    %41 = vector.broadcast %35 : vector<24x1xf32> to vector<24x128xf32>
    %42 = arith.minimumf %41, %40 : vector<24x128xf32>
    %43 = vector.broadcast %21 : vector<24x1xf32> to vector<24x128xf32>
    %44 = arith.mulf %42, %43 : vector<24x128xf32>
    %c0_15 = arith.constant 0 : index
    %c0_16 = arith.constant 0 : index
    %45 = vector.load %arg4[%c0_15, %c0_16] : memref<24x128xf32, #tpu.memory_space<vmem>>, vector<24x128xf32>
    tpu.vector_store %arg4[%c0_15, %c0_16], %44 {strides = array<i32>} : memref<24x128xf32, #tpu.memory_space<vmem>>, vector<24x128xf32>,
    %c0_17 = arith.constant 0 : index
    %c0_18 = arith.constant 0 : index
    %46 = vector.load %arg5[%c0_17, %c0_18] : memref<24x1xf32, #tpu.memory_space<vmem>>, vector<24x1xf32>
    tpu.vector_store %arg5[%c0_17, %c0_18], %21 {strides = array<i32>} : memref<24x1xf32, #tpu.memory_space<vmem>>, vector<24x1xf32>,
    %c0_19 = arith.constant 0 : index
    %c0_20 = arith.constant 0 : index
    %47 = vector.load %arg6[%c0_19, %c0_20] : memref<24x1xf32, #tpu.memory_space<vmem>>, vector<24x1xf32>
    tpu.vector_store %arg6[%c0_19, %c0_20], %31 {strides = array<i32>} : memref<24x1xf32, #tpu.memory_space<vmem>>, vector<24x1xf32>,
    return
  }
  func.func @transform_0(%arg0: i32) -> (i32, i32) {
    %c0_i32 = arith.constant 0 : i32
    %c0_i32_0 = arith.constant 0 : i32
    return %arg0, %c0_i32 : i32, i32
  }
  func.func @transform_1(%arg0: i32) -> (i32, i32) {
    %c0_i32 = arith.constant 0 : i32
    %c0_i32_0 = arith.constant 0 : i32
    return %arg0, %c0_i32 : i32, i32
  }
  func.func @transform_2(%arg0: i32) -> (i32, i32) {
    %c0_i32 = arith.constant 0 : i32
    %c0_i32_0 = arith.constant 0 : i32
    return %arg0, %c0_i32 : i32, i32
  }
  func.func @transform_3(%arg0: i32) -> (i32, i32) {
    %c0_i32 = arith.constant 0 : i32
    %c0_i32_0 = arith.constant 0 : i32
    return %arg0, %c0_i32 : i32, i32
  }
  func.func @transform_4(%arg0: i32) -> (i32, i32) {
    %c0_i32 = arith.constant 0 : i32
    %c0_i32_0 = arith.constant 0 : i32
    return %arg0, %c0_i32 : i32, i32
  }
  func.func @transform_5(%arg0: i32) -> (i32, i32) {
    %c0_i32 = arith.constant 0 : i32
    %c0_i32_0 = arith.constant 0 : i32
    return %arg0, %c0_i32 : i32, i32
  }
}

</mosaic_0001>

<llo_original>
// kernel: tpu_custom_call.1
$region0: #{tpu_custom_call.1}
  #allocation0 [shape = 'u32[]', space=smem, size = 0x4, offset = 0x4, fixed_abs, tag = 'smem constant byte address 0x4 - core index']
  #allocation1 [shape = 'u32[72,128]{1,0:T(1,128)}', space=vmem, size = 0x9000, scoped, tag = 'internal scratch']
  %s0 = inlined_call_operand.vmem [shape: f32[36,128], index: 0, kind: input, shape index: {}]
  %s1 = inlined_call_operand.vmem [shape: f32[36,1], index: 1, kind: input, shape index: {}]
  %s2 = inlined_call_operand.vmem [shape: f32[36,1], index: 2, kind: input, shape index: {}]
  %s3 = inlined_call_operand.hbm [shape: f32[36,128], index: 3, kind: output, shape index: {0}]
  %s4 = inlined_call_operand.vmem [shape: f32[36,1], index: 4, kind: output, shape index: {1}]
  %s5 = inlined_call_operand.vmem [shape: f32[36,1], index: 5, kind: output, shape index: {2}]
  %6 = xla_tuple %s3, %s4, %s5
  %s7 = sld [smem:[#allocation0]]
  $region157: #{tpu_custom_call.1} parent=0
    _
  %s9 = ssub.s32 1, %s7
  %s10 = scalar_select 0, %s9, %s7
  $region1: #{tpu_custom_call.1} parent=0
    #allocation2 [shape = 'u8[24576]{0}', space=vmem, size = 0x6000, scoped, tag = 'output window, operand 0']
    #allocation3 [shape = 's32[2]{0}', space=sflag, size = 0x8, scoped, tag = 'scoped memory for tpu_custom_call.1']
    #allocation4 [shape = 'u8[24576]{0}', space=vmem, size = 0x6000, scoped, tag = 'output window, operand 1']
    #allocation5 [shape = 'u8[24576]{0}', space=vmem, size = 0x6000, scoped, tag = 'output window, operand 2']
    %11 = vsyncpa [#allocation3], 0
    %s12 = scalar_lea.sflag [#allocation3], 1
    %13 = vsyncpa %s12, 0
    loop: start=0, step=1, limit=4
    $region2: #{tpu_custom_call.1} parent=1 // loop_pre_header
      _
    $region3: #{tpu_custom_call.1} parent=1 // loop_header
      %s15 = sphi 0, %s19
      %p16 = scmp.ge.s32.totalorder %s15, 4
      %s25 = sphi 0, %s27
      %s28 = sphi 0, %s25
      %s29 = sphi 0, %s28
      %s45 = sphi 0, %s29
      %s51 = sphi 0, %s53
      %s54 = sphi 0, %s51
      %s55 = sphi 0, %s54
      %s71 = sphi 0, %s55
      %s77 = sphi 0, %s79
      %s80 = sphi 0, %s77
      %s81 = sphi 0, %s80
      %s97 = sphi 0, %s81
      %s103 = sphi 0, %s105
      %s106 = sphi 0, %s103
      %s107 = sphi 0, %s106
      %s123 = sphi 0, %s107
      %s129 = sphi 0, %s131
      %s132 = sphi 0, %s129
      %s133 = sphi 0, %s132
      %s149 = sphi 0, %s133
      %s155 = sphi 0, %s157
      %s158 = sphi 0, %s155
      %s159 = sphi 0, %s158
      %s175 = sphi 0, %s159
    $region4: #{tpu_custom_call.1} parent=1 // loop_header_branch
      %18 = sbr.rel (%p16) target = $region8
    $region5: #{tpu_custom_call.1} parent=1 // loop_body
      %s20 = ssub.s32 %s15, 1
      %s21 = ssub.s32 %s15, 2
      %s22 = sadd.s32 %s15, 1
      %s23 = ssub.s32 %s15, %s22
      %p24 = scmp.eq.s32.totalorder %s23, 0
      %s26 = sadd.s32 %s25, 1
      %s27 = scalar_select %p24, %s25, %s26
      %p30 = pneg %p24
      %p31 = scmp.eq.s32.totalorder %s15, 1
      %p32 = por %p30, %p31
      %p33 = scmp.ne.s32.totalorder %s25, %s28
      %p34 = scmp.eq.s32.totalorder %s15, 0
      %p35 = por %p33, %p34
      %p36 = scmp.ne.s32.totalorder %s25, %s28
      %p37 = scmp.eq.s32.totalorder %s20, 1
      %p38 = por %p36, %p37
      %p39 = scmp.ne.s32.totalorder %s28, %s29
      %p40 = scmp.eq.s32.totalorder %s20, 0
      %p41 = por %p39, %p40
      %p42 = scmp.ne.s32.totalorder %s28, %s29
      %p43 = scmp.eq.s32.totalorder %s21, 1
      %p44 = por %p42, %p43
      %p46 = scmp.ne.s32.totalorder %s29, %s45
      %p47 = scmp.eq.s32.totalorder %s21, 0
      %p48 = por %p46, %p47
      %s49 = ssub.s32 %s15, %s22
      %p50 = scmp.eq.s32.totalorder %s49, 0
      %s52 = sadd.s32 %s51, 1
      %s53 = scalar_select %p50, %s51, %s52
      %p56 = pneg %p50
      %p57 = scmp.eq.s32.totalorder %s15, 1
      %p58 = por %p56, %p57
      %p59 = scmp.ne.s32.totalorder %s51, %s54
      %p60 = scmp.eq.s32.totalorder %s15, 0
      %p61 = por %p59, %p60
      %p62 = scmp.ne.s32.totalorder %s51, %s54
      %p63 = scmp.eq.s32.totalorder %s20, 1
      %p64 = por %p62, %p63
      %p65 = scmp.ne.s32.totalorder %s54, %s55
      %p66 = scmp.eq.s32.totalorder %s20, 0
      %p67 = por %p65, %p66
      %p68 = scmp.ne.s32.totalorder %s54, %s55
      %p69 = scmp.eq.s32.totalorder %s21, 1
      %p70 = por %p68, %p69
      %p72 = scmp.ne.s32.totalorder %s55, %s71
      %p73 = scmp.eq.s32.totalorder %s21, 0
      %p74 = por %p72, %p73
      %s75 = ssub.s32 %s15, %s22
      %p76 = scmp.eq.s32.totalorder %s75, 0
      %s78 = sadd.s32 %s77, 1
      %s79 = scalar_select %p76, %s77, %s78
      %p82 = pneg %p76
      %p83 = scmp.eq.s32.totalorder %s15, 1
      %p84 = por %p82, %p83
      %p85 = scmp.ne.s32.totalorder %s77, %s80
      %p86 = scmp.eq.s32.totalorder %s15, 0
      %p87 = por %p85, %p86
      %p88 = scmp.ne.s32.totalorder %s77, %s80
      %p89 = scmp.eq.s32.totalorder %s20, 1
      %p90 = por %p88, %p89
      %p91 = scmp.ne.s32.totalorder %s80, %s81
      %p92 = scmp.eq.s32.totalorder %s20, 0
      %p93 = por %p91, %p92
      %p94 = scmp.ne.s32.totalorder %s80, %s81
      %p95 = scmp.eq.s32.totalorder %s21, 1
      %p96 = por %p94, %p95
      %p98 = scmp.ne.s32.totalorder %s81, %s97
      %p99 = scmp.eq.s32.totalorder %s21, 0
      %p100 = por %p98, %p99
      %s101 = ssub.s32 %s15, %s22
      %p102 = scmp.eq.s32.totalorder %s101, 0
      %s104 = sadd.s32 %s103, 1
      %s105 = scalar_select %p102, %s103, %s104
      %p108 = pneg %p102
      %p109 = scmp.eq.s32.totalorder %s15, 1
      %p110 = por %p108, %p109
      %p111 = scmp.ne.s32.totalorder %s103, %s106
      %p112 = scmp.eq.s32.totalorder %s15, 0
      %p113 = por %p111, %p112
      %p114 = scmp.ne.s32.totalorder %s103, %s106
      %p115 = scmp.eq.s32.totalorder %s20, 1
      %p116 = por %p114, %p115
      %p117 = scmp.ne.s32.totalorder %s106, %s107
      %p118 = scmp.eq.s32.totalorder %s20, 0
      %p119 = por %p117, %p118
      %p120 = scmp.ne.s32.totalorder %s106, %s107
      %p121 = scmp.eq.s32.totalorder %s21, 1
      %p122 = por %p120, %p121
      %p124 = scmp.ne.s32.totalorder %s107, %s123
      %p125 = scmp.eq.s32.totalorder %s21, 0
      %p126 = por %p124, %p125
      %s127 = ssub.s32 %s15, %s22
      %p128 = scmp.eq.s32.totalorder %s127, 0
      %s130 = sadd.s32 %s129, 1
      %s131 = scalar_select %p128, %s129, %s130
      %p134 = pneg %p128
      %p135 = scmp.eq.s32.totalorder %s15, 1
      %p136 = por %p134, %p135
      %p137 = scmp.ne.s32.totalorder %s129, %s132
      %p138 = scmp.eq.s32.totalorder %s15, 0
      %p139 = por %p137, %p138
      %p140 = scmp.ne.s32.totalorder %s129, %s132
      %p141 = scmp.eq.s32.totalorder %s20, 1
      %p142 = por %p140, %p141
      %p143 = scmp.ne.s32.totalorder %s132, %s133
      %p144 = scmp.eq.s32.totalorder %s20, 0
      %p145 = por %p143, %p144
      %p146 = scmp.ne.s32.totalorder %s132, %s133
      %p147 = scmp.eq.s32.totalorder %s21, 1
      %p148 = por %p146, %p147
      %p150 = scmp.ne.s32.totalorder %s133, %s149
      %p151 = scmp.eq.s32.totalorder %s21, 0
      %p152 = por %p150, %p151
      %s153 = ssub.s32 %s15, %s22
      %p154 = scmp.eq.s32.totalorder %s153, 0
      %s156 = sadd.s32 %s155, 1
      %s157 = scalar_select %p154, %s155, %s156
      %p160 = pneg %p154
      %p161 = scmp.eq.s32.totalorder %s15, 1
      %p162 = por %p160, %p161
      %p163 = scmp.ne.s32.totalorder %s155, %s158
      %p164 = scmp.eq.s32.totalorder %s15, 0
      %p165 = por %p163, %p164
      %p166 = scmp.ne.s32.totalorder %s155, %s158
      %p167 = scmp.eq.s32.totalorder %s20, 1
      %p168 = por %p166, %p167
      %p169 = scmp.ne.s32.totalorder %s158, %s159
      %p170 = scmp.eq.s32.totalorder %s20, 0
      %p171 = por %p169, %p170
      %p172 = scmp.ne.s32.totalorder %s158, %s159
      %p173 = scmp.eq.s32.totalorder %s21, 1
      %p174 = por %p172, %p173
      %p176 = scmp.ne.s32.totalorder %s159, %s175
      %p177 = scmp.eq.s32.totalorder %s21, 0
      %p178 = por %p176, %p177
      %p179 = scmp.le.s32.totalorder 1, %s15
      %p180 = scmp.lt.s32.totalorder %s15, 3
      %p181 = pnand %p179, %p180
      %p182 = pneg %p181
      // Predicated region
      $region9: #{tpu_custom_call.1} parent=5 // pred_check
        _
      $region10: #{tpu_custom_call.1} parent=5 // pred_check_branch
        %184 = sbr.rel (%p181) target = $region12
      $region11: #{tpu_custom_call.1} parent=5 // pred_region
        %s185 = ssub.s32 %s15, 1
      $region12: #{tpu_custom_call.1} parent=5 // pred_fallthru
        _
      %p186 = scmp.lt.s32.totalorder %s15, 2
      // Predicated region
      $region13: #{tpu_custom_call.1} parent=5 // pred_check
        %p187 = pneg %p186
      $region14: #{tpu_custom_call.1} parent=5 // pred_check_branch
        %189 = sbr.rel (%p187) target = $region16
      $region15: #{tpu_custom_call.1} parent=5 // pred_region
        // Predicated region
        $region17: #{tpu_custom_call.1} parent=15 // pred_check
          %p190 = pneg %p35
        $region18: #{tpu_custom_call.1} parent=15 // pred_check_branch
          %192 = sbr.rel (%p190) target = $region20
        $region19: #{tpu_custom_call.1} parent=15 // pred_region
          %s193 = smul.u32 3, %s15
          %s194 = ssub.s32 5, %s193
          %p195 = scmp.lt.s32.totalorder %s194, 3
          %s196 = scalar_select %p195, %s194, 3
          %s197 = smul.u32 8, %s196
          %p198 = scmp.lt.s32.totalorder %s193, 4
          %s199 = scalar_select %p198, %s193, 4
          %s200 = smul.addr %s199, 8
          %s201 = scalar_lea.vmem %s0, %s200
          %s202 = smul.u32 3, %s15
          %s203 = ssub.s32 5, %s202
          %p204 = scmp.lt.s32.totalorder %s203, 3
          %s205 = scalar_select %p204, %s203, 3
          %s206 = smul.u32 8, %s205
        $region20: #{tpu_custom_call.1} parent=15 // pred_fallthru
          _
        // Predicated region
        $region21: #{tpu_custom_call.1} parent=15 // pred_check
          %p207 = pneg %p61
        $region22: #{tpu_custom_call.1} parent=15 // pred_check_branch
          %209 = sbr.rel (%p207) target = $region24
        $region23: #{tpu_custom_call.1} parent=15 // pred_region
          %s210 = smul.u32 3, %s15
          %s211 = ssub.s32 5, %s210
          %p212 = scmp.lt.s32.totalorder %s211, 3
          %s213 = scalar_select %p212, %s211, 3
          %s214 = smul.u32 8, %s213
          %p215 = scmp.lt.s32.totalorder %s210, 4
          %s216 = scalar_select %p215, %s210, 4
          %s217 = smul.addr %s216, 8
          %s218 = scalar_lea.vmem %s1, %s217
          %s219 = smul.u32 3, %s15
          %s220 = ssub.s32 5, %s219
          %p221 = scmp.lt.s32.totalorder %s220, 3
          %s222 = scalar_select %p221, %s220, 3
          %s223 = smul.u32 8, %s222
        $region24: #{tpu_custom_call.1} parent=15 // pred_fallthru
          _
        // Predicated region
        $region25: #{tpu_custom_call.1} parent=15 // pred_check
          %p224 = pneg %p87
        $region26: #{tpu_custom_call.1} parent=15 // pred_check_branch
          %226 = sbr.rel (%p224) target = $region28
        $region27: #{tpu_custom_call.1} parent=15 // pred_region
          %s227 = smul.u32 3, %s15
          %s228 = ssub.s32 5, %s227
          %p229 = scmp.lt.s32.totalorder %s228, 3
          %s230 = scalar_select %p229, %s228, 3
          %s231 = smul.u32 8, %s230
          %p232 = scmp.lt.s32.totalorder %s227, 4
          %s233 = scalar_select %p232, %s227, 4
          %s234 = smul.addr %s233, 8
          %s235 = scalar_lea.vmem %s2, %s234
          %s236 = smul.u32 3, %s15
          %s237 = ssub.s32 5, %s236
          %p238 = scmp.lt.s32.totalorder %s237, 3
          %s239 = scalar_select %p238, %s237, 3
          %s240 = smul.u32 8, %s239
        $region28: #{tpu_custom_call.1} parent=15 // pred_fallthru
          _
      $region16: #{tpu_custom_call.1} parent=5 // pred_fallthru
        _
      %p241 = scmp.le.s32.totalorder 1, %s15
      %p242 = scmp.lt.s32.totalorder %s15, 3
      %p243 = pnand %p241, %p242
      %p244 = pneg %p243
      // Predicated region
      $region29: #{tpu_custom_call.1} parent=5 // pred_check
        _
      $region30: #{tpu_custom_call.1} parent=5 // pred_check_branch
        %246 = sbr.rel (%p243) target = $region32
      $region31: #{tpu_custom_call.1} parent=5 // pred_region
        %s247 = ssub.s32 %s15, 1
        %s248 = smul.u32 3, %s20
        %s249 = ssub.s32 5, %s248
        %p250 = scmp.lt.s32.totalorder %s249, 3
        %s251 = scalar_select %p250, %s249, 3
        %s252 = smul.u32 8, %s251
        %p253 = scmp.lt.s32.totalorder %s248, 4
        %s254 = scalar_select %p253, %s248, 4
        %s255 = smul.addr %s254, 8
        %s256 = scalar_lea.vmem %s0, %s255
        %p257 = pneg %p41
        %p258 = pneg %p38
        %s259 = smul.u32 3, %s20
        %s260 = ssub.s32 5, %s259
        %p261 = scmp.lt.s32.totalorder %s260, 3
        %s262 = scalar_select %p261, %s260, 3
        %s263 = smul.u32 8, %s262
        %p264 = scmp.lt.s32.totalorder %s259, 4
        %s265 = scalar_select %p264, %s259, 4
        %s266 = smul.addr %s265, 8
        %s267 = scalar_lea.vmem %s1, %s266
        %p268 = pneg %p67
        %p269 = pneg %p64
        %s270 = smul.u32 3, %s20
        %s271 = ssub.s32 5, %s270
        %p272 = scmp.lt.s32.totalorder %s271, 3
        %s273 = scalar_select %p272, %s271, 3
        %s274 = smul.u32 8, %s273
        %p275 = scmp.lt.s32.totalorder %s270, 4
        %s276 = scalar_select %p275, %s270, 4
        %s277 = smul.addr %s276, 8
        %s278 = scalar_lea.vmem %s2, %s277
        %p279 = pneg %p93
        %p280 = pneg %p90
        %p281 = pneg %p119
        %p282 = pneg %p116
        %s283 = sand.u32 %s106, 1
        %s284 = scalar_lea.sflag [#allocation3], %s283
        %s285 = sand.u32 %s106, 1
        %s286 = smul.addr %s285, 24
        %s287 = scalar_lea.vmem [#allocation2], %s286
        %p288 = pneg %p145
        %p289 = pneg %p142
        %s290 = sand.u32 %s132, 1
        %s291 = sand.u32 %s132, 1
        %s292 = smul.addr %s291, 24
        %s293 = scalar_lea.vmem [#allocation4], %s292
        %p294 = pneg %p171
        %p295 = pneg %p168
        %s296 = sand.u32 %s158, 1
        %s297 = sand.u32 %s158, 1
        %s298 = smul.addr %s297, 24
        %s299 = scalar_lea.vmem [#allocation5], %s298
        %s300 = smul.u32 3, %s20
        %s301 = ssub.s32 5, %s300
        %p302 = scmp.lt.s32.totalorder %s301, 3
        %s303 = scalar_select %p302, %s301, 3
        %s304 = smul.u32 8, %s303
        %p305 = scmp.lt.s32.totalorder %s300, 4
        %s306 = scalar_select %p305, %s300, 4
        %s307 = smul.addr %s306, 8
        %s308 = scalar_lea.vmem %s0, %s307
        %s309 = smul.u32 3, %s20
        %s310 = ssub.s32 5, %s309
        %p311 = scmp.lt.s32.totalorder %s310, 3
        %s312 = scalar_select %p311, %s310, 3
        %s313 = smul.u32 8, %s312
        %s314 = smul.u32 3, %s20
        %s315 = ssub.s32 5, %s314
        %p316 = scmp.lt.s32.totalorder %s315, 3
        %s317 = scalar_select %p316, %s315, 3
        %s318 = smul.u32 8, %s317
        %p319 = scmp.lt.s32.totalorder %s314, 4
        %s320 = scalar_select %p319, %s314, 4
        %s321 = smul.addr %s320, 8
        %s322 = scalar_lea.vmem %s1, %s321
        %s323 = smul.u32 3, %s20
        %s324 = ssub.s32 5, %s323
        %p325 = scmp.lt.s32.totalorder %s324, 3
        %s326 = scalar_select %p325, %s324, 3
        %s327 = smul.u32 8, %s326
        %s328 = smul.u32 3, %s20
        %s329 = ssub.s32 5, %s328
        %p330 = scmp.lt.s32.totalorder %s329, 3
        %s331 = scalar_select %p330, %s329, 3
        %s332 = smul.u32 8, %s331
        %p333 = scmp.lt.s32.totalorder %s328, 4
        %s334 = scalar_select %p333, %s328, 4
        %s335 = smul.addr %s334, 8
        %s336 = scalar_lea.vmem %s2, %s335
        %s337 = smul.u32 3, %s20
        %s338 = ssub.s32 5, %s337
        %p339 = scmp.lt.s32.totalorder %s338, 3
        %s340 = scalar_select %p339, %s338, 3
        %s341 = smul.u32 8, %s340
        %s342 = smul.u32 3, %s20
        %s343 = ssub.s32 5, %s342
        %p344 = scmp.lt.s32.totalorder %s343, 3
        %s345 = scalar_select %p344, %s343, 3
        %s346 = smul.u32 8, %s345
        %s347 = smul.u32 3, %s20
        %s348 = ssub.s32 5, %s347
        %p349 = scmp.lt.s32.totalorder %s348, 3
        %s350 = scalar_select %p349, %s348, 3
        %s351 = smul.u32 8, %s350
        %s352 = smul.u32 3, %s20
        %s353 = ssub.s32 5, %s352
        %p354 = scmp.lt.s32.totalorder %s353, 3
        %s355 = scalar_select %p354, %s353, 3
        %s356 = smul.u32 8, %s355
        %v357 = vld [vmem:[%s308] sm:$0xff]
        %v358 = vld [vmem:[%s308 + $0x8] sm:$0xff]
        %v359 = vld [vmem:[%s308 + $0x10] sm:$0xff]
        %360 = vmin.xlane.f32.xlu0 %v357
        %v361 = vpop.xlane.xlu0 %360
        %362 = vmin.xlane.f32.xlu0 %v358
        %v363 = vpop.xlane.xlu0 %362
        %364 = vmin.xlane.f32.xlu0 %v359
        %v365 = vpop.xlane.xlu0 %364
        %366 = vmax.xlane.f32.xlu0 %v357
        %v367 = vpop.xlane.xlu0 %366
        %368 = vmax.xlane.f32.xlu0 %v358
        %v369 = vpop.xlane.xlu0 %368
        %370 = vmax.xlane.f32.xlu0 %v359
        %v371 = vpop.xlane.xlu0 %370
        %v372 = vld [vmem:[%s322] sm:$0xff]
        %v373 = vld [vmem:[%s322 + $0x8] sm:$0xff]
        %v374 = vld [vmem:[%s322 + $0x10] sm:$0xff]
        %v375 = vxor.u32 %v372, 2147483648
        %v376 = vxor.u32 %v373, 2147483648
        %v377 = vxor.u32 %v374, 2147483648
        %v378 = vmul.f32 %v375, 1.442695
        %v379 = vpow.pop %v378
        %v380 = vmul.f32 %v376, 1.442695
        %v381 = vpow.pop %v380
        %v382 = vmul.f32 %v377, 1.442695
        %v383 = vpow.pop %v382
        %v384 = vadd.f32 %v379, 1.0
        %v385 = vadd.f32 %v381, 1.0
        %v386 = vadd.f32 %v383, 1.0
        %v387 = vrcp.pop %v384
        %v388 = vmul.f32 %v384, %v387
        %v389 = vsub.f32 1.0, %v388
        %v390 = vmul.f32 %v387, %v389
        %v391 = vadd.f32 %v387, %v390
        %vm392 = vweird.f32 %v384
        %vm393 = vweird.f32 %v387
        %vm394 = vmor %vm392, %vm393
        %v395 = vsel %vm394, %v387, %v391
        %v396 = vand.u32 2147483647, %v384
        %vm397 = vcmp.eq.f32.partialorder %v396, 8.507059e+37
        %v398 = vand.u32 %v384, 2147483648
        %v399 = vor.u32 1.1754944e-38, %v398
        %v400 = vsel %vm397, %v399, %v395
        %v401 = vmul.f32 1.0, %v400
        %v402 = vrcp.pop %v385
        %v403 = vmul.f32 %v385, %v402
        %v404 = vsub.f32 1.0, %v403
        %v405 = vmul.f32 %v402, %v404
        %v406 = vadd.f32 %v402, %v405
        %vm407 = vweird.f32 %v385
        %vm408 = vweird.f32 %v402
        %vm409 = vmor %vm407, %vm408
        %v410 = vsel %vm409, %v402, %v406
        %v411 = vand.u32 2147483647, %v385
        %vm412 = vcmp.eq.f32.partialorder %v411, 8.507059e+37
        %v413 = vand.u32 %v385, 2147483648
        %v414 = vor.u32 1.1754944e-38, %v413
        %v415 = vsel %vm412, %v414, %v410
        %v416 = vmul.f32 1.0, %v415
        %v417 = vrcp.pop %v386
        %v418 = vmul.f32 %v386, %v417
        %v419 = vsub.f32 1.0, %v418
        %v420 = vmul.f32 %v417, %v419
        %v421 = vadd.f32 %v417, %v420
        %vm422 = vweird.f32 %v386
        %vm423 = vweird.f32 %v417
        %vm424 = vmor %vm422, %vm423
        %v425 = vsel %vm424, %v417, %v421
        %v426 = vand.u32 2147483647, %v386
        %vm427 = vcmp.eq.f32.partialorder %v426, 8.507059e+37
        %v428 = vand.u32 %v386, 2147483648
        %v429 = vor.u32 1.1754944e-38, %v428
        %v430 = vsel %vm427, %v429, %v425
        %v431 = vmul.f32 1.0, %v430
        %v432 = vld [vmem:[%s336] sm:$0xff]
        %v433 = vld [vmem:[%s336 + $0x8] sm:$0xff]
        %v434 = vld [vmem:[%s336 + $0x10] sm:$0xff]
        %v435 = vxor.u32 %v432, 2147483648
        %v436 = vxor.u32 %v433, 2147483648
        %v437 = vxor.u32 %v434, 2147483648
        %v438 = vmul.f32 %v435, 1.442695
        %v439 = vpow.pop %v438
        %v440 = vmul.f32 %v436, 1.442695
        %v441 = vpow.pop %v440
        %v442 = vmul.f32 %v437, 1.442695
        %v443 = vpow.pop %v442
        %v444 = vadd.f32 %v439, 1.0
        %v445 = vadd.f32 %v441, 1.0
        %v446 = vadd.f32 %v443, 1.0
        %v447 = vrcp.pop %v444
        %v448 = vmul.f32 %v444, %v447
        %v449 = vsub.f32 1.0, %v448
        %v450 = vmul.f32 %v447, %v449
        %v451 = vadd.f32 %v447, %v450
        %vm452 = vweird.f32 %v444
        %vm453 = vweird.f32 %v447
        %vm454 = vmor %vm452, %vm453
        %v455 = vsel %vm454, %v447, %v451
        %v456 = vand.u32 2147483647, %v444
        %vm457 = vcmp.eq.f32.partialorder %v456, 8.507059e+37
        %v458 = vand.u32 %v444, 2147483648
        %v459 = vor.u32 1.1754944e-38, %v458
        %v460 = vsel %vm457, %v459, %v455
        %v461 = vmul.f32 1.0, %v460
        %v462 = vrcp.pop %v445
        %v463 = vmul.f32 %v445, %v462
        %v464 = vsub.f32 1.0, %v463
        %v465 = vmul.f32 %v462, %v464
        %v466 = vadd.f32 %v462, %v465
        %vm467 = vweird.f32 %v445
        %vm468 = vweird.f32 %v462
        %vm469 = vmor %vm467, %vm468
        %v470 = vsel %vm469, %v462, %v466
        %v471 = vand.u32 2147483647, %v445
        %vm472 = vcmp.eq.f32.partialorder %v471, 8.507059e+37
        %v473 = vand.u32 %v445, 2147483648
        %v474 = vor.u32 1.1754944e-38, %v473
        %v475 = vsel %vm472, %v474, %v470
        %v476 = vmul.f32 1.0, %v475
        %v477 = vrcp.pop %v446
        %v478 = vmul.f32 %v446, %v477
        %v479 = vsub.f32 1.0, %v478
        %v480 = vmul.f32 %v477, %v479
        %v481 = vadd.f32 %v477, %v480
        %vm482 = vweird.f32 %v446
        %vm483 = vweird.f32 %v477
        %vm484 = vmor %vm482, %vm483
        %v485 = vsel %vm484, %v477, %v481
        %v486 = vand.u32 2147483647, %v446
        %vm487 = vcmp.eq.f32.partialorder %v486, 8.507059e+37
        %v488 = vand.u32 %v446, 2147483648
        %v489 = vor.u32 1.1754944e-38, %v488
        %v490 = vsel %vm487, %v489, %v485
        %v491 = vmul.f32 1.0, %v490
        %v492 = vmul.f32 %v401, %v367
        %v493 = vmul.f32 %v416, %v369
        %v494 = vmul.f32 %v431, %v371
        %v495 = vmul.f32 %v461, %v361
        %v496 = vmul.f32 %v476, %v363
        %v497 = vmul.f32 %v491, %v365
        %v498 = vsub.f32 %v492, %v495
        %v499 = vsub.f32 %v493, %v496
        %v500 = vsub.f32 %v494, %v497
        %v501 = vrcp.pop 255.0
        %v502 = vmul.f32 255.0, %v501
        %v503 = vsub.f32 1.0, %v502
        %v504 = vmul.f32 %v501, %v503
        %v505 = vadd.f32 %v501, %v504
        %vm506 = vweird.f32 %v501
        %v507 = vsel %vm506, %v501, %v505
        %v508 = vmul.f32 %v498, %v507
        %v509 = vmul.f32 %v499, %v507
        %v510 = vmul.f32 %v500, %v507
        %v511 = vrcp.pop %v508
        %v512 = vmul.f32 %v508, %v511
        %v513 = vsub.f32 1.0, %v512
        %v514 = vmul.f32 %v511, %v513
        %v515 = vadd.f32 %v511, %v514
        %vm516 = vweird.f32 %v508
        %vm517 = vweird.f32 %v511
        %vm518 = vmor %vm516, %vm517
        %v519 = vsel %vm518, %v511, %v515
        %v520 = vand.u32 2147483647, %v508
        %vm521 = vcmp.eq.f32.partialorder %v520, 8.507059e+37
        %v522 = vand.u32 %v508, 2147483648
        %v523 = vor.u32 1.1754944e-38, %v522
        %v524 = vsel %vm521, %v523, %v519
        %v525 = vmul.f32 1.0, %v524
        %v526 = vrcp.pop %v509
        %v527 = vmul.f32 %v509, %v526
        %v528 = vsub.f32 1.0, %v527
        %v529 = vmul.f32 %v526, %v528
        %v530 = vadd.f32 %v526, %v529
        %vm531 = vweird.f32 %v509
        %vm532 = vweird.f32 %v526
        %vm533 = vmor %vm531, %vm532
        %v534 = vsel %vm533, %v526, %v530
        %v535 = vand.u32 2147483647, %v509
        %vm536 = vcmp.eq.f32.partialorder %v535, 8.507059e+37
        %v537 = vand.u32 %v509, 2147483648
        %v538 = vor.u32 1.1754944e-38, %v537
        %v539 = vsel %vm536, %v538, %v534
        %v540 = vmul.f32 1.0, %v539
        %v541 = vrcp.pop %v510
        %v542 = vmul.f32 %v510, %v541
        %v543 = vsub.f32 1.0, %v542
        %v544 = vmul.f32 %v541, %v543
        %v545 = vadd.f32 %v541, %v544
        %vm546 = vweird.f32 %v510
        %vm547 = vweird.f32 %v541
        %vm548 = vmor %vm546, %vm547
        %v549 = vsel %vm548, %v541, %v545
        %v550 = vand.u32 2147483647, %v510
        %vm551 = vcmp.eq.f32.partialorder %v550, 8.507059e+37
        %v552 = vand.u32 %v510, 2147483648
        %v553 = vor.u32 1.1754944e-38, %v552
        %v554 = vsel %vm551, %v553, %v549
        %v555 = vmul.f32 1.0, %v554
        %v556 = vsub.f32 0.0, %v495
        %v557 = vsub.f32 0.0, %v496
        %v558 = vsub.f32 0.0, %v497
        %v559 = vmul.f32 %v556, %v525
        %v560 = vmul.f32 %v557, %v540
        %v561 = vmul.f32 %v558, %v555
        %v562 = vmax.f32 %v559, -10000.0
        %v563 = vmax.f32 %v560, -10000.0
        %v564 = vmax.f32 %v561, -10000.0
        %v565 = vmin.f32 %v562, 10000.0
        %v566 = vmin.f32 %v563, 10000.0
        %v567 = vmin.f32 %v564, 10000.0
        %v568 = vround.ne.pseudo %v565
        %v569 = vround.ne.pseudo %v566
        %v570 = vround.ne.pseudo %v567
        %v571 = vsub.f32 0.0, %v568
        %v572 = vsub.f32 0.0, %v569
        %v573 = vsub.f32 0.0, %v570
        %v574 = vsub.f32 255.0, %v568
        %v575 = vsub.f32 255.0, %v569
        %v576 = vsub.f32 255.0, %v570
        %578 = vset.pattern.permute.xlu0 0
        %579 = vperm.xlu0 %578, %v525
        %v580 = vpop.permute.xlu0 %579
        %583 = vset.pattern.permute.xlu0 0
        %584 = vperm.xlu0 %583, %v540
        %v585 = vpop.permute.xlu0 %584
        %588 = vset.pattern.permute.xlu0 0
        %589 = vperm.xlu0 %588, %v555
        %v590 = vpop.permute.xlu0 %589
        %v592 = vmul.f32 %v357, %v580
        %v593 = vmul.f32 %v358, %v585
        %v594 = vmul.f32 %v359, %v590
        %v595 = vround.ne.pseudo %v592
        %v596 = vround.ne.pseudo %v593
        %v597 = vround.ne.pseudo %v594
        %599 = vset.pattern.permute.xlu0 0
        %600 = vperm.xlu0 %599, %v571
        %v601 = vpop.permute.xlu0 %600
        %604 = vset.pattern.permute.xlu0 0
        %605 = vperm.xlu0 %604, %v572
        %v606 = vpop.permute.xlu0 %605
        %609 = vset.pattern.permute.xlu0 0
        %610 = vperm.xlu0 %609, %v573
        %v611 = vpop.permute.xlu0 %610
        %v613 = vmax.f32 %v601, %v595
        %v614 = vmax.f32 %v606, %v596
        %v615 = vmax.f32 %v611, %v597
        %617 = vset.pattern.permute.xlu0 0
        %618 = vperm.xlu0 %617, %v574
        %v619 = vpop.permute.xlu0 %618
        %622 = vset.pattern.permute.xlu0 0
        %623 = vperm.xlu0 %622, %v575
        %v624 = vpop.permute.xlu0 %623
        %627 = vset.pattern.permute.xlu0 0
        %628 = vperm.xlu0 %627, %v576
        %v629 = vpop.permute.xlu0 %628
        %v631 = vmin.f32 %v619, %v613
        %v632 = vmin.f32 %v624, %v614
        %v633 = vmin.f32 %v629, %v615
        %635 = vset.pattern.permute.xlu0 0
        %636 = vperm.xlu0 %635, %v508
        %v637 = vpop.permute.xlu0 %636
        %640 = vset.pattern.permute.xlu0 0
        %641 = vperm.xlu0 %640, %v509
        %v642 = vpop.permute.xlu0 %641
        %645 = vset.pattern.permute.xlu0 0
        %646 = vperm.xlu0 %645, %v510
        %v647 = vpop.permute.xlu0 %646
        %v649 = vmul.f32 %v631, %v637
        %v650 = vmul.f32 %v632, %v642
        %v651 = vmul.f32 %v633, %v647
        %652 = vst [vmem:[%s287] sm:$0xff] %v649
        %653 = vst [vmem:[%s287 + $0x8] sm:$0xff] %v650
        %654 = vst [vmem:[%s287 + $0x10] sm:$0xff] %v651
        %vm655 = vcmask 7168
        %656 = vst.msk [vmem:[%s293] sm:$0xff] %vm655, %v508
        %657 = vst.msk [vmem:[%s293 + $0x8] sm:$0xff] %vm655, %v509
        %658 = vst.msk [vmem:[%s293 + $0x10] sm:$0xff] %vm655, %v510
        %659 = vst.msk [vmem:[%s299] sm:$0xff] %vm655, %v568
        %660 = vst.msk [vmem:[%s299 + $0x8] sm:$0xff] %vm655, %v569
        %661 = vst.msk [vmem:[%s299 + $0x10] sm:$0xff] %vm655, %v570
        %s662 = sand.u32 %s106, 1
        %s663 = scalar_lea.sflag [#allocation3], %s662
        %s664 = sand.u32 %s106, 1
        %s665 = smul.addr %s664, 24
        %s666 = scalar_lea.vmem [#allocation2], %s665
        %s667 = sand.u32 %s132, 1
        %s668 = sand.u32 %s132, 1
        %s669 = smul.addr %s668, 24
        %s670 = scalar_lea.vmem [#allocation4], %s669
        %s671 = sand.u32 %s158, 1
        %s672 = sand.u32 %s158, 1
        %s673 = smul.addr %s672, 24
        %s674 = scalar_lea.vmem [#allocation5], %s673
        // Predicated region
        $region33: #{tpu_custom_call.1} parent=31 // pred_check
          %p675 = pneg %p116
        $region34: #{tpu_custom_call.1} parent=31 // pred_check_branch
          %677 = sbr.rel (%p675) target = $region36
        $region35: #{tpu_custom_call.1} parent=31 // pred_region
          %s678 = smul.u32 3, %s20
          %s679 = ssub.s32 5, %s678
          %p680 = scmp.lt.s32.totalorder %s679, 3
          %s681 = scalar_select %p680, %s679, 3
          %s682 = smul.u32 8, %s681
          %s683 = ssub.s32 24, %s682
          %s684 = sshll.u32 %s683, 4
          %685 = vsyncadd %s663, %s684
          %p686 = scmp.ne.s32.totalorder 0, %s682
          %s687 = smul.addr %s678, 8
          %s688 = scalar_lea.hbm %s3, %s687
          %s689 = smul.u32 8, %s681
          %s690 = sshll.u32 %s666, 4
          %s691 = int_to_ptr.vmem [resolvable:$true] %s690
          %s692 = sshll.u32 %s688, 4
          %s693 = int_to_ptr.hbm [resolvable:$true] %s692
          %s694 = sshll.u32 %s689, 4
          %698 = dma.vmem_to_hbm [thread:$0]  (%p686), %s691, %s694, %s693, %s663, 128, 128, 8
        $region36: #{tpu_custom_call.1} parent=31 // pred_fallthru
          _
        // Predicated region
        $region37: #{tpu_custom_call.1} parent=31 // pred_check
          %p699 = pneg %p142
        $region38: #{tpu_custom_call.1} parent=31 // pred_check_branch
          %701 = sbr.rel (%p699) target = $region40
        $region39: #{tpu_custom_call.1} parent=31 // pred_region
          %s702 = smul.u32 3, %s20
          %s703 = ssub.s32 5, %s702
          %p704 = scmp.lt.s32.totalorder %s703, 3
          %s705 = scalar_select %p704, %s703, 3
          %s706 = smul.u32 8, %s705
          %p707 = scmp.ne.s32.totalorder 0, %s706
          %s708 = smul.addr %s702, 8
          %s709 = scalar_lea.vmem %s4, %s708
          // Predicated region
          $region41: #{tpu_custom_call.1} parent=39 // pred_check
            %p710 = pneg %p707
          $region42: #{tpu_custom_call.1} parent=39 // pred_check_branch
            %712 = sbr.rel (%p710) target = $region44
          $region43: #{tpu_custom_call.1} parent=39 // pred_region
            // Predicated region
            $region45: #{tpu_custom_call.1} parent=43 // pred_check
              _
            $region46: #{tpu_custom_call.1} parent=43 // pred_check_branch
              %714 = sbr.rel (0) target = $region48
            $region47: #{tpu_custom_call.1} parent=43 // pred_region
              // Predicated region
              $region67: #{tpu_custom_call.1} parent=47 // pred_check
                _
              $region68: #{tpu_custom_call.1} parent=47 // pred_check_branch
                %769 = sbr.rel (0) target = $region70
              $region69: #{tpu_custom_call.1} parent=47 // pred_region
                %s770 = sdiv.u32.pop %s705, 3
                %s771 = srem.u32.pop %s705, 3
                // While loop
                $region71: #{tpu_custom_call.1} parent=69 // loop_pre_header
                  _
                $region72: #{tpu_custom_call.1} parent=69 // loop_header
                  %s773 = sphi 0, %s775
                  %p774 = scmp.ge.s32.totalorder %s773, %s770
                  %s778 = sphi 0, %s789
                  %s779 = sphi %s670, %s792
                  %s780 = sphi %s709, %s793
                $region73: #{tpu_custom_call.1} parent=69 // loop_header_branch
                  %777 = sbr.rel (%p774) target = $region77
                $region74: #{tpu_custom_call.1} parent=69 // loop_body
                  %v781 = vld [vmem:[%s779] sm:$0xff]
                  %782 = vst [vmem:[%s780] sm:$0xff] %v781
                  %v783 = vld [vmem:[%s779 + $0x8] sm:$0xff]
                  %784 = vst [vmem:[%s780 + $0x8] sm:$0xff] %v783
                  %v785 = vld [vmem:[%s779 + $0x10] sm:$0xff]
                  %786 = vst [vmem:[%s780 + $0x10] sm:$0xff] %v785
                  %s787 = sadd.s32 1, %s778
                  %p788 = scmp.ge.s32.totalorder %s787, %s770
                  %s789 = scalar_select %p788, 0, %s787
                  %s790 = smul.u32 %s789, 24
                  %s791 = smul.u32 %s789, 24
                  %s792 = scalar_lea.vmem %s670, %s790 [#allocation4]
                  %s793 = scalar_lea.vmem %s709, %s791
                $region75: #{tpu_custom_call.1} parent=69 // loop_footer
                  %s775 = sadd.s32 %s773, 1
                $region76: #{tpu_custom_call.1} parent=69 // loop_footer_branch
                  %772 = sbr.rel target = $region72
                $region77: #{tpu_custom_call.1} parent=69 // loop_exit
                  _
                %s794 = sdiv.u32.pop %s705, 3
                %s795 = srem.u32.pop %s705, 3
                %s796 = smul.u32 %s794, 3
                %s797 = smul.u32 8, %s796
                %s798 = scalar_lea.vmem %s670, %s797 [#allocation4]
                %s799 = smul.u32 8, %s796
                %s800 = scalar_lea.vmem %s709, %s799
                // While loop
                $region78: #{tpu_custom_call.1} parent=69 // loop_pre_header
                  _
                $region79: #{tpu_custom_call.1} parent=69 // loop_header
                  %s802 = sphi 0, %s804
                  %p803 = scmp.ge.s32.totalorder %s802, %s795
                  %s807 = sphi 0, %s814
                  %s808 = sphi %s798, %s817
                  %s809 = sphi %s800, %s818
                $region80: #{tpu_custom_call.1} parent=69 // loop_header_branch
                  %806 = sbr.rel (%p803) target = $region84
                $region81: #{tpu_custom_call.1} parent=69 // loop_body
                  %v810 = vld [vmem:[%s808] sm:$0xff]
                  %811 = vst [vmem:[%s809] sm:$0xff] %v810
                  %s812 = sadd.s32 1, %s807
                  %p813 = scmp.ge.s32.totalorder %s812, %s795
                  %s814 = scalar_select %p813, 0, %s812
                  %s815 = smul.u32 %s814, 8
                  %s816 = smul.u32 %s814, 8
                  %s817 = scalar_lea.vmem %s798, %s815 [#allocation4]
                  %s818 = scalar_lea.vmem %s800, %s816
                $region82: #{tpu_custom_call.1} parent=69 // loop_footer
                  %s804 = sadd.s32 %s802, 1
                $region83: #{tpu_custom_call.1} parent=69 // loop_footer_branch
                  %801 = sbr.rel target = $region79
                $region84: #{tpu_custom_call.1} parent=69 // loop_exit
                  _
              $region70: #{tpu_custom_call.1} parent=47 // pred_fallthru
                _
              // Predicated region
              $region85: #{tpu_custom_call.1} parent=47 // pred_check
                _
              $region86: #{tpu_custom_call.1} parent=47 // pred_check_branch
                %820 = sbr.rel target = $region88
              $region87: #{tpu_custom_call.1} parent=47 // pred_region
                _
              $region88: #{tpu_custom_call.1} parent=47 // pred_fallthru
                _
            $region48: #{tpu_custom_call.1} parent=43 // pred_fallthru
              _
            // Predicated region
            $region49: #{tpu_custom_call.1} parent=43 // pred_check
              _
            $region50: #{tpu_custom_call.1} parent=43 // pred_check_branch
              %716 = sbr.rel target = $region52
            $region51: #{tpu_custom_call.1} parent=43 // pred_region
              %s718 = ssub.s32 256, 1
              %s719 = sdiv.u32.pop %s705, 3
              %s720 = srem.u32.pop %s705, 3
              // While loop
              $region53: #{tpu_custom_call.1} parent=51 // loop_pre_header
                _
              $region54: #{tpu_custom_call.1} parent=51 // loop_header
                %s722 = sphi 0, %s724
                %p723 = scmp.ge.s32.totalorder %s722, %s719
                %s727 = sphi 0, %s738
                %s728 = sphi %s670, %s741
                %s729 = sphi %s709, %s742
              $region55: #{tpu_custom_call.1} parent=51 // loop_header_branch
                %726 = sbr.rel (%p723) target = $region59
              $region56: #{tpu_custom_call.1} parent=51 // loop_body
                %v730 = vld [vmem:[%s728] sm:%s718]
                %731 = vst [vmem:[%s729] sm:%s718] %v730
                %v732 = vld [vmem:[%s728 + $0x8] sm:%s718]
                %733 = vst [vmem:[%s729 + $0x8] sm:%s718] %v732
                %v734 = vld [vmem:[%s728 + $0x10] sm:%s718]
                %735 = vst [vmem:[%s729 + $0x10] sm:%s718] %v734
                %s736 = sadd.s32 1, %s727
                %p737 = scmp.ge.s32.totalorder %s736, %s719
                %s738 = scalar_select %p737, 0, %s736
                %s739 = smul.u32 %s738, 24
                %s740 = smul.u32 %s738, 24
                %s741 = scalar_lea.vmem %s670, %s739 [#allocation4]
                %s742 = scalar_lea.vmem %s709, %s740
              $region57: #{tpu_custom_call.1} parent=51 // loop_footer
                %s724 = sadd.s32 %s722, 1
              $region58: #{tpu_custom_call.1} parent=51 // loop_footer_branch
                %721 = sbr.rel target = $region54
              $region59: #{tpu_custom_call.1} parent=51 // loop_exit
                _
              %s743 = sdiv.u32.pop %s705, 3
              %s744 = srem.u32.pop %s705, 3
              %s745 = smul.u32 %s743, 3
              %s746 = smul.u32 8, %s745
              %s747 = scalar_lea.vmem %s670, %s746 [#allocation4]
              %s748 = smul.u32 8, %s745
              %s749 = scalar_lea.vmem %s709, %s748
              // While loop
              $region60: #{tpu_custom_call.1} parent=51 // loop_pre_header
                _
              $region61: #{tpu_custom_call.1} parent=51 // loop_header
                %s751 = sphi 0, %s753
                %p752 = scmp.ge.s32.totalorder %s751, %s744
                %s756 = sphi 0, %s763
                %s757 = sphi %s747, %s766
                %s758 = sphi %s749, %s767
              $region62: #{tpu_custom_call.1} parent=51 // loop_header_branch
                %755 = sbr.rel (%p752) target = $region66
              $region63: #{tpu_custom_call.1} parent=51 // loop_body
                %v759 = vld [vmem:[%s757] sm:%s718]
                %760 = vst [vmem:[%s758] sm:%s718] %v759
                %s761 = sadd.s32 1, %s756
                %p762 = scmp.ge.s32.totalorder %s761, %s744
                %s763 = scalar_select %p762, 0, %s761
                %s764 = smul.u32 %s763, 8
                %s765 = smul.u32 %s763, 8
                %s766 = scalar_lea.vmem %s747, %s764 [#allocation4]
                %s767 = scalar_lea.vmem %s749, %s765
              $region64: #{tpu_custom_call.1} parent=51 // loop_footer
                %s753 = sadd.s32 %s751, 1
              $region65: #{tpu_custom_call.1} parent=51 // loop_footer_branch
                %750 = sbr.rel target = $region61
              $region66: #{tpu_custom_call.1} parent=51 // loop_exit
                _
            $region52: #{tpu_custom_call.1} parent=43 // pred_fallthru
              _
          $region44: #{tpu_custom_call.1} parent=39 // pred_fallthru
            _
          %821 = vnop
        $region40: #{tpu_custom_call.1} parent=31 // pred_fallthru
          _
        // Predicated region
        $region89: #{tpu_custom_call.1} parent=31 // pred_check
          %p822 = pneg %p168
        $region90: #{tpu_custom_call.1} parent=31 // pred_check_branch
          %824 = sbr.rel (%p822) target = $region92
        $region91: #{tpu_custom_call.1} parent=31 // pred_region
          %s825 = smul.u32 3, %s20
          %s826 = ssub.s32 5, %s825
          %p827 = scmp.lt.s32.totalorder %s826, 3
          %s828 = scalar_select %p827, %s826, 3
          %s829 = smul.u32 8, %s828
          %p830 = scmp.ne.s32.totalorder 0, %s829
          %s831 = smul.addr %s825, 8
          %s832 = scalar_lea.vmem %s5, %s831
          // Predicated region
          $region93: #{tpu_custom_call.1} parent=91 // pred_check
            %p833 = pneg %p830
          $region94: #{tpu_custom_call.1} parent=91 // pred_check_branch
            %835 = sbr.rel (%p833) target = $region96
          $region95: #{tpu_custom_call.1} parent=91 // pred_region
            // Predicated region
            $region97: #{tpu_custom_call.1} parent=95 // pred_check
              _
            $region98: #{tpu_custom_call.1} parent=95 // pred_check_branch
              %837 = sbr.rel (0) target = $region100
            $region99: #{tpu_custom_call.1} parent=95 // pred_region
              // Predicated region
              $region119: #{tpu_custom_call.1} parent=99 // pred_check
                _
              $region120: #{tpu_custom_call.1} parent=99 // pred_check_branch
                %892 = sbr.rel (0) target = $region122
              $region121: #{tpu_custom_call.1} parent=99 // pred_region
                %s893 = sdiv.u32.pop %s828, 3
                %s894 = srem.u32.pop %s828, 3
                // While loop
                $region123: #{tpu_custom_call.1} parent=121 // loop_pre_header
                  _
                $region124: #{tpu_custom_call.1} parent=121 // loop_header
                  %s896 = sphi 0, %s898
                  %p897 = scmp.ge.s32.totalorder %s896, %s893
                  %s901 = sphi 0, %s912
                  %s902 = sphi %s674, %s915
                  %s903 = sphi %s832, %s916
                $region125: #{tpu_custom_call.1} parent=121 // loop_header_branch
                  %900 = sbr.rel (%p897) target = $region129
                $region126: #{tpu_custom_call.1} parent=121 // loop_body
                  %v904 = vld [vmem:[%s902] sm:$0xff]
                  %905 = vst [vmem:[%s903] sm:$0xff] %v904
                  %v906 = vld [vmem:[%s902 + $0x8] sm:$0xff]
                  %907 = vst [vmem:[%s903 + $0x8] sm:$0xff] %v906
                  %v908 = vld [vmem:[%s902 + $0x10] sm:$0xff]
                  %909 = vst [vmem:[%s903 + $0x10] sm:$0xff] %v908
                  %s910 = sadd.s32 1, %s901
                  %p911 = scmp.ge.s32.totalorder %s910, %s893
                  %s912 = scalar_select %p911, 0, %s910
                  %s913 = smul.u32 %s912, 24
                  %s914 = smul.u32 %s912, 24
                  %s915 = scalar_lea.vmem %s674, %s913 [#allocation5]
                  %s916 = scalar_lea.vmem %s832, %s914
                $region127: #{tpu_custom_call.1} parent=121 // loop_footer
                  %s898 = sadd.s32 %s896, 1
                $region128: #{tpu_custom_call.1} parent=121 // loop_footer_branch
                  %895 = sbr.rel target = $region124
                $region129: #{tpu_custom_call.1} parent=121 // loop_exit
                  _
                %s917 = sdiv.u32.pop %s828, 3
                %s918 = srem.u32.pop %s828, 3
                %s919 = smul.u32 %s917, 3
                %s920 = smul.u32 8, %s919
                %s921 = scalar_lea.vmem %s674, %s920 [#allocation5]
                %s922 = smul.u32 8, %s919
                %s923 = scalar_lea.vmem %s832, %s922
                // While loop
                $region130: #{tpu_custom_call.1} parent=121 // loop_pre_header
                  _
                $region131: #{tpu_custom_call.1} parent=121 // loop_header
                  %s925 = sphi 0, %s927
                  %p926 = scmp.ge.s32.totalorder %s925, %s918
                  %s930 = sphi 0, %s937
                  %s931 = sphi %s921, %s940
                  %s932 = sphi %s923, %s941
                $region132: #{tpu_custom_call.1} parent=121 // loop_header_branch
                  %929 = sbr.rel (%p926) target = $region136
                $region133: #{tpu_custom_call.1} parent=121 // loop_body
                  %v933 = vld [vmem:[%s931] sm:$0xff]
                  %934 = vst [vmem:[%s932] sm:$0xff] %v933
                  %s935 = sadd.s32 1, %s930
                  %p936 = scmp.ge.s32.totalorder %s935, %s918
                  %s937 = scalar_select %p936, 0, %s935
                  %s938 = smul.u32 %s937, 8
                  %s939 = smul.u32 %s937, 8
                  %s940 = scalar_lea.vmem %s921, %s938 [#allocation5]
                  %s941 = scalar_lea.vmem %s923, %s939
                $region134: #{tpu_custom_call.1} parent=121 // loop_footer
                  %s927 = sadd.s32 %s925, 1
                $region135: #{tpu_custom_call.1} parent=121 // loop_footer_branch
                  %924 = sbr.rel target = $region131
                $region136: #{tpu_custom_call.1} parent=121 // loop_exit
                  _
              $region122: #{tpu_custom_call.1} parent=99 // pred_fallthru
                _
              // Predicated region
              $region137: #{tpu_custom_call.1} parent=99 // pred_check
                _
              $region138: #{tpu_custom_call.1} parent=99 // pred_check_branch
                %943 = sbr.rel target = $region140
              $region139: #{tpu_custom_call.1} parent=99 // pred_region
                _
              $region140: #{tpu_custom_call.1} parent=99 // pred_fallthru
                _
            $region100: #{tpu_custom_call.1} parent=95 // pred_fallthru
              _
            // Predicated region
            $region101: #{tpu_custom_call.1} parent=95 // pred_check
              _
            $region102: #{tpu_custom_call.1} parent=95 // pred_check_branch
              %839 = sbr.rel target = $region104
            $region103: #{tpu_custom_call.1} parent=95 // pred_region
              %s841 = ssub.s32 256, 1
              %s842 = sdiv.u32.pop %s828, 3
              %s843 = srem.u32.pop %s828, 3
              // While loop
              $region105: #{tpu_custom_call.1} parent=103 // loop_pre_header
                _
              $region106: #{tpu_custom_call.1} parent=103 // loop_header
                %s845 = sphi 0, %s847
                %p846 = scmp.ge.s32.totalorder %s845, %s842
                %s850 = sphi 0, %s861
                %s851 = sphi %s674, %s864
                %s852 = sphi %s832, %s865
              $region107: #{tpu_custom_call.1} parent=103 // loop_header_branch
                %849 = sbr.rel (%p846) target = $region111
              $region108: #{tpu_custom_call.1} parent=103 // loop_body
                %v853 = vld [vmem:[%s851] sm:%s841]
                %854 = vst [vmem:[%s852] sm:%s841] %v853
                %v855 = vld [vmem:[%s851 + $0x8] sm:%s841]
                %856 = vst [vmem:[%s852 + $0x8] sm:%s841] %v855
                %v857 = vld [vmem:[%s851 + $0x10] sm:%s841]
                %858 = vst [vmem:[%s852 + $0x10] sm:%s841] %v857
                %s859 = sadd.s32 1, %s850
                %p860 = scmp.ge.s32.totalorder %s859, %s842
                %s861 = scalar_select %p860, 0, %s859
                %s862 = smul.u32 %s861, 24
                %s863 = smul.u32 %s861, 24
                %s864 = scalar_lea.vmem %s674, %s862 [#allocation5]
                %s865 = scalar_lea.vmem %s832, %s863
              $region109: #{tpu_custom_call.1} parent=103 // loop_footer
                %s847 = sadd.s32 %s845, 1
              $region110: #{tpu_custom_call.1} parent=103 // loop_footer_branch
                %844 = sbr.rel target = $region106
              $region111: #{tpu_custom_call.1} parent=103 // loop_exit
                _
              %s866 = sdiv.u32.pop %s828, 3
              %s867 = srem.u32.pop %s828, 3
              %s868 = smul.u32 %s866, 3
              %s869 = smul.u32 8, %s868
              %s870 = scalar_lea.vmem %s674, %s869 [#allocation5]
              %s871 = smul.u32 8, %s868
              %s872 = scalar_lea.vmem %s832, %s871
              // While loop
              $region112: #{tpu_custom_call.1} parent=103 // loop_pre_header
                _
              $region113: #{tpu_custom_call.1} parent=103 // loop_header
                %s874 = sphi 0, %s876
                %p875 = scmp.ge.s32.totalorder %s874, %s867
                %s879 = sphi 0, %s886
                %s880 = sphi %s870, %s889
                %s881 = sphi %s872, %s890
              $region114: #{tpu_custom_call.1} parent=103 // loop_header_branch
                %878 = sbr.rel (%p875) target = $region118
              $region115: #{tpu_custom_call.1} parent=103 // loop_body
                %v882 = vld [vmem:[%s880] sm:%s841]
                %883 = vst [vmem:[%s881] sm:%s841] %v882
                %s884 = sadd.s32 1, %s879
                %p885 = scmp.ge.s32.totalorder %s884, %s867
                %s886 = scalar_select %p885, 0, %s884
                %s887 = smul.u32 %s886, 8
                %s888 = smul.u32 %s886, 8
                %s889 = scalar_lea.vmem %s870, %s887 [#allocation5]
                %s890 = scalar_lea.vmem %s872, %s888
              $region116: #{tpu_custom_call.1} parent=103 // loop_footer
                %s876 = sadd.s32 %s874, 1
              $region117: #{tpu_custom_call.1} parent=103 // loop_footer_branch
                %873 = sbr.rel target = $region113
              $region118: #{tpu_custom_call.1} parent=103 // loop_exit
                _
            $region104: #{tpu_custom_call.1} parent=95 // pred_fallthru
              _
          $region96: #{tpu_custom_call.1} parent=91 // pred_fallthru
            _
          %944 = vnop
        $region92: #{tpu_custom_call.1} parent=31 // pred_fallthru
          _
      $region32: #{tpu_custom_call.1} parent=5 // pred_fallthru
        _
      %p945 = scmp.le.s32.totalorder 2, %s15
      // Predicated region
      $region141: #{tpu_custom_call.1} parent=5 // pred_check
        %p946 = pneg %p945
      $region142: #{tpu_custom_call.1} parent=5 // pred_check_branch
        %948 = sbr.rel (%p946) target = $region144
      $region143: #{tpu_custom_call.1} parent=5 // pred_region
        %s949 = ssub.s32 %s15, 2
        // Predicated region
        $region145: #{tpu_custom_call.1} parent=143 // pred_check
          %p950 = pneg %p122
        $region146: #{tpu_custom_call.1} parent=143 // pred_check_branch
          %952 = sbr.rel (%p950) target = $region148
        $region147: #{tpu_custom_call.1} parent=143 // pred_region
          %s953 = sand.u32 %s107, 1
          %s954 = scalar_lea.sflag [#allocation3], %s953
          %s955 = sand.u32 %s107, 1
          %s956 = smul.addr %s955, 24
          %s957 = scalar_lea.vmem [#allocation2], %s956
          %959 = dma.done %s954, 384
        $region148: #{tpu_custom_call.1} parent=143 // pred_fallthru
          _
        // Predicated region
        $region149: #{tpu_custom_call.1} parent=143 // pred_check
          %p960 = pneg %p148
        $region150: #{tpu_custom_call.1} parent=143 // pred_check_branch
          %962 = sbr.rel (%p960) target = $region152
        $region151: #{tpu_custom_call.1} parent=143 // pred_region
          %s963 = sand.u32 %s133, 1
          %s964 = sand.u32 %s133, 1
          %s965 = smul.addr %s964, 24
          %s966 = scalar_lea.vmem [#allocation4], %s965
        $region152: #{tpu_custom_call.1} parent=143 // pred_fallthru
          _
        // Predicated region
        $region153: #{tpu_custom_call.1} parent=143 // pred_check
          %p967 = pneg %p174
        $region154: #{tpu_custom_call.1} parent=143 // pred_check_branch
          %969 = sbr.rel (%p967) target = $region156
        $region155: #{tpu_custom_call.1} parent=143 // pred_region
          %s970 = sand.u32 %s159, 1
          %s971 = sand.u32 %s159, 1
          %s972 = smul.addr %s971, 24
          %s973 = scalar_lea.vmem [#allocation5], %s972
        $region156: #{tpu_custom_call.1} parent=143 // pred_fallthru
          _
      $region144: #{tpu_custom_call.1} parent=5 // pred_fallthru
        _
    $region6: #{tpu_custom_call.1} parent=1 // loop_footer
      %s19 = sadd.s32 1, %s15
    $region7: #{tpu_custom_call.1} parent=1 // loop_footer_branch
      %14 = sbr.rel target = $region3
    $region8: #{tpu_custom_call.1} parent=1 // loop_exit
      _
    %974 = vsyncpa [#allocation3], 1
    %s975 = scalar_lea.sflag [#allocation3], 1
    %976 = vsyncpa %s975, 1

</llo_original>
